<compile_context>
chip_gen: v7x
topology: tpu7x:2x2x1
jax: 0.10.0
libtpu: 0.0.40
codegen_flags: <defaults>
</compile_context>

<pallas_src>
import jax
import jax.numpy as jnp
from jax.experimental import pallas as pl
from jax.experimental.pallas import tpu as pltpu

BN_EPS = 1e-5
NH = 3            # num_handmade_features (use_gdelt=False)
LANE = 128        # lane alignment for packed-parameter segments
SUBLANE = 8       # sublane alignment for packed-weight row ranges


def _round_up(n, m):
    return (n + m - 1) // m * m


def _bn_relu(x, gamma, beta):
    """nn.BatchNorm1d in training mode (biased batch stats) followed by ReLU."""
    mu = jnp.mean(x, axis=0, keepdims=True)
    var = jnp.mean((x - mu) * (x - mu), axis=0, keepdims=True)
    y = (x - mu) * jax.lax.rsqrt(var + BN_EPS) * gamma + beta
    return jnp.maximum(y, 0.0)


def _param_layout(F, H, D1):
    """Static (offset, length) layout of the packed [1, P] parameter vector.

    Every segment starts at a multiple of 128 lanes so in-kernel slices are
    lane-aligned.  g2/bb2 are split into the 'combined' part (F cols) and the
    'handmade' part (NH cols) so the split-matmul path needs no misaligned
    slices.
    """
    names_lens = [
        ("g1", D1), ("bb1", D1), ("b1", F),
        ("g2a", F), ("bb2a", F), ("g2b", NH), ("bb2b", NH),
        ("b2", H), ("g3", H), ("bb3", H), ("b3", 2),
        ("means", NH), ("inv_stds", NH),
    ]
    layout = {}
    off = 0
    for name, n in names_lens:
        layout[name] = (off, n)
        off += _round_up(n, LANE)
    return layout, off  # (layout, total padded length P)


def _weight_layout(F, H):
    """Sublane-aligned row layout of the stacked w2/w3 buffer."""
    w2a_row = 0
    w2b_row = _round_up(F, SUBLANE)
    w3_row = _round_up(w2b_row + NH, SUBLANE)
    n_rows = _round_up(w3_row + H, SUBLANE)
    n_cols = max(H, 2)
    return w2a_row, w2b_row, w3_row, n_rows, n_cols


def pack_params(params):
    """One-time host-side packing + casting (hoisted out of the forward path)."""
    D1, F = params["w1"].shape
    H = params["w2"].shape[1]

    layout, P = _param_layout(F, H, D1)
    src = {
        "g1": params["g1"], "bb1": params["bb1"], "b1": params["b1"],
        "g2a": params["g2"][:, :F], "bb2a": params["bb2"][:, :F],
        "g2b": params["g2"][:, F:], "bb2b": params["bb2"][:, F:],
        "b2": params["b2"],
        "g3": params["g3"], "bb3": params["bb3"], "b3": params["b3"],
        "means": params["means"], "inv_stds": 1.0 / params["stds"],
    }
    pvec = jnp.zeros((1, P), jnp.float32)
    for name, (off, n) in layout.items():
        seg = jnp.asarray(src[name], jnp.float32).reshape(1, n)
        pvec = pvec.at[:, off:off + n].set(seg)

    w2a_row, w2b_row, w3_row, n_rows, n_cols = _weight_layout(F, H)
    wbuf = jnp.zeros((n_rows, n_cols), jnp.float32)
    wbuf = wbuf.at[w2a_row:w2a_row + F, :H].set(params["w2"][:F].astype(jnp.float32))
    wbuf = wbuf.at[w2b_row:w2b_row + NH, :H].set(params["w2"][F:].astype(jnp.float32))
    wbuf = wbuf.at[w3_row:w3_row + H, :2].set(params["w3"].astype(jnp.float32))

    return {
        "pvec": pvec,                                  # [1, P]      f32
        "w1": params["w1"].astype(jnp.float32),        # [D1, F]     f32
        "wbuf": wbuf,                                  # [n_rows,32] f32 (w2 + w3)
    }


def _make_kernel(F, H, D1, layout, hm_off, w2a_row, w2b_row, w3_row):
    """Build the fused kernel with all static offsets baked in."""

    def kernel(
        xbuf_ref,   # [B, XW]  lanes 0:D1 = flattened tweet features,
                    #          lanes hm_off:hm_off+3 = raw handmade features (f32)
        pvec_ref,   # [1, P]   packed BN/bias/standardization params (f32)
        w1_ref,     # [D1, F]  tweets_combiner linear weight (f32)
        wbuf_ref,   # [R, 32]  stacked w2 (split) + w3 weights (f32)
        out_ref,    # [B, 2]   softmax probabilities (f32)
    ):
        def pslice(name):
            off, n = layout[name]
            return pvec_ref[:, off:off + n]        # static, lane-aligned: free

        x = xbuf_ref[:, 0:D1]                      # [B, D1]
        hm_raw = xbuf_ref[:, hm_off:hm_off + NH]   # [B, 3]

        # ---- tweets_combiner: BN + ReLU + Linear -----------------------------
        h1 = _bn_relu(x, pslice("g1"), pslice("bb1"))
        combined = (
            jnp.dot(h1, w1_ref[...], preferred_element_type=jnp.float32)
            + pslice("b1")
        )  # [B, F]

        # ---- handmade standardization (host-precomputed 1/std, no divide) ----
        hm = (hm_raw - pslice("means")) * pslice("inv_stds")       # [B, 3]

        # ---- feature_extractor: split BN + split Linear ----------------------
        # Per-column BN is exactly separable, and
        #   dot(concat(a, b), W) == dot(a, W[:F]) + dot(b, W[F:]),
        # so this is mathematically identical to the concat version but avoids
        # the lane-offset-8 relayout.
        h2a = _bn_relu(combined, pslice("g2a"), pslice("bb2a"))    # [B, F]
        h2b = _bn_relu(hm, pslice("g2b"), pslice("bb2b"))          # [B, 3]
        w2a = wbuf_ref[w2a_row:w2a_row + F, 0:H]                   # [F, H]
        w2b = wbuf_ref[w2b_row:w2b_row + NH, 0:H]                  # [3, H]
        h2 = (
            jnp.dot(h2a, w2a, preferred_element_type=jnp.float32)
            + jnp.dot(h2b, w2b, preferred_element_type=jnp.float32)
            + pslice("b2")
        )  # [B, H]

        # ---- classifier: BN + ReLU + Linear + Softmax(dim=1) -----------------
        h3 = _bn_relu(h2, pslice("g3"), pslice("bb3"))
        w3 = wbuf_ref[w3_row:w3_row + H, 0:2]                      # [H, 2]
        logits = (
            jnp.dot(h3, w3, preferred_element_type=jnp.float32)
            + pslice("b3")
        )  # [B, 2]
        m = jnp.max(logits, axis=1, keepdims=True)
        e = jnp.exp(logits - m)
        # Exact divide: EUP/VPU slack is free here, and rows sum to 1 exactly.
        # NOTE: [B, 2] output is a masked lane store; writeback bytes are noise.
        out_ref[...] = e / jnp.sum(e, axis=1, keepdims=True)

    return kernel


def build_forward(tweet_features_dim, hidden_dim, num_tweets_per_user=100):
    """Build a jitted forward(x, hm, packed) -> [B, 2] softmax probabilities.

    Whole problem (~60 KB) fits in VMEM -> single grid-less pallas_call.
    """
    F = tweet_features_dim
    H = hidden_dim
    D1 = num_tweets_per_user * F

    layout, _ = _param_layout(F, H, D1)
    hm_off = _round_up(D1, LANE)               # 128-aligned lane offset for hm
    x_width = _round_up(hm_off + NH, LANE)
    w2a_row, w2b_row, w3_row, _, _ = _weight_layout(F, H)

    kernel = _make_kernel(F, H, D1, layout, hm_off, w2a_row, w2b_row, w3_row)
    vmem = pl.BlockSpec(memory_space=pltpu.MemorySpace.VMEM)

    @jax.jit
    def forward(x, hm, packed):
        B = x.shape[0]
        # Splice handmade features into the x buffer so they ride the x DMA.
        xbuf = jnp.zeros((B, x_width), jnp.float32)
        xbuf = xbuf.at[:, 0:D1].set(x.astype(jnp.float32))
        xbuf = xbuf.at[:, hm_off:hm_off + NH].set(hm.astype(jnp.float32))
        return pl.pallas_call(
            kernel,
            out_shape=jax.ShapeDtypeStruct((B, 2), jnp.float32),
            in_specs=[vmem, vmem, vmem, vmem],
            out_specs=vmem,
        )(xbuf, packed["pvec"], packed["w1"], packed["wbuf"])

    return forward


def make_params(key, tweet_features_dim, hidden_dim, num_tweets_per_user=100):
    """Deterministic synthetic parameters (shapes follow BotClassifier.__init__)."""
    F = tweet_features_dim
    H = hidden_dim
    D1 = num_tweets_per_user * F        # tweets_combiner input dim

    ks = jax.random.split(key, 3)

    def lin(k, fan_in, fan_out):
        bound = 1.0 / jnp.sqrt(fan_in)
        kw, kb = jax.random.split(k)
        w = jax.random.uniform(kw, (fan_in, fan_out), jnp.float32, -bound, bound)
        b = jax.random.uniform(kb, (1, fan_out), jnp.float32, -bound, bound)
        return w, b

    w1, b1 = lin(ks[0], D1, F)
    w2, b2 = lin(ks[1], F + NH, H)
    w3, b3 = lin(ks[2], H, 2)

    return {
        # tweets_combiner BN (PyTorch default affine init: gamma=1, beta=0)
        "g1": jnp.ones((1, D1), jnp.float32),
        "bb1": jnp.zeros((1, D1), jnp.float32),
        "w1": w1, "b1": b1,
        # feature_extractor BN over (F + 3) features
        "g2": jnp.ones((1, F + NH), jnp.float32),
        "bb2": jnp.zeros((1, F + NH), jnp.float32),
        "w2": w2, "b2": b2,
        # classifier BN
        "g3": jnp.ones((1, H), jnp.float32),
        "bb3": jnp.zeros((1, H), jnp.float32),
        "w3": w3, "b3": b3,
        # handmade-feature standardization constants (use_gdelt=False branch)
        "means": jnp.array([[56675.0, 3270.8, 665.64]], jnp.float32),
        "stds": jnp.array([[22061.0, 21951.0, 1324.1]], jnp.float32),
    }


if __name__ == "__main__":
    B = 8                      # batch of users
    tweet_features_dim = 8
    hidden_dim = 32
    num_tweets_per_user = 100  # hardcoded in BotClassifier

    key = jax.random.PRNGKey(0)
    k_x, k_hm, k_p = jax.random.split(key, 3)

    # Output of the (untranslated) TweetFeatureExtractor, already flattened
    # per-user:  [B, num_tweets_per_user * tweet_features_dim]
    x = jax.random.normal(
        k_x, (B, num_tweets_per_user * tweet_features_dim), jnp.float32
    )
    # Raw handmade features: avg tweet time diff, followers_count, friends_count
    hm = jnp.abs(jax.random.normal(k_hm, (B, 3), jnp.float32)) * jnp.array(
        [[50000.0, 3000.0, 600.0]], jnp.float32
    )

    params = make_params(k_p, tweet_features_dim, hidden_dim, num_tweets_per_user)
    packed = pack_params(params)   # one-time packing/casting, out of the hot path
    forward = build_forward(tweet_features_dim, hidden_dim, num_tweets_per_user)

    probs = forward(x, hm, packed)
    probs = jax.block_until_ready(probs)

    assert probs.shape == (B, 2)
    assert bool(jnp.all(jnp.isfinite(probs)))
    assert bool(jnp.all(probs >= 0.0))
    # rows of a softmax must sum to ~1 (exact divide -> tight tolerance)
    assert bool(jnp.allclose(jnp.sum(probs, axis=1), 1.0, atol=1e-5))
    print("KERNEL_OK")
</pallas_src>

<mosaic_0001>
module attributes {stable_mosaic.version = 11 : i64} {
  func.func @kernel(%arg0: memref<8x1024xf32, #tpu.memory_space<vmem>>, %arg1: memref<1x3200xf32, #tpu.memory_space<vmem>>, %arg2: memref<800x8xf32, #tpu.memory_space<vmem>>, %arg3: memref<48x32xf32, #tpu.memory_space<vmem>>, %arg4: memref<8x2xf32, #tpu.memory_space<vmem>>) attributes {dimension_semantics = [], scalar_prefetch = 0 : i64, scratch_operands = 0 : i64, tpu.core_type = #tpu.core_type<tc>} {
    %c0 = arith.constant 0 : index
    %c0_0 = arith.constant 0 : index
    %0 = vector.load %arg0[%c0, %c0_0] : memref<8x1024xf32, #tpu.memory_space<vmem>>, vector<8x800xf32>
    %c0_1 = arith.constant 0 : index
    %c896 = arith.constant 896 : index
    %1 = vector.load %arg0[%c0_1, %c896] : memref<8x1024xf32, #tpu.memory_space<vmem>>, vector<8x3xf32>
    %c0_2 = arith.constant 0 : index
    %c0_3 = arith.constant 0 : index
    %2 = vector.load %arg1[%c0_2, %c0_3] : memref<1x3200xf32, #tpu.memory_space<vmem>>, vector<1x800xf32>
    %c0_4 = arith.constant 0 : index
    %c896_5 = arith.constant 896 : index
    %3 = vector.load %arg1[%c0_4, %c896_5] : memref<1x3200xf32, #tpu.memory_space<vmem>>, vector<1x800xf32>
    %cst = arith.constant dense<0.000000e+00> : vector<800xf32>
    %4 = vector.multi_reduction <add>, %0, %cst [0] : vector<8x800xf32> to vector<800xf32>
    %5 = vector.shape_cast %4 : vector<800xf32> to vector<1x800xf32>
    %cst_6 = arith.constant 8.000000e+00 : f32
    %6 = vector.broadcast %cst_6 : f32 to vector<1x800xf32>
    %7 = arith.divf %5, %6 : vector<1x800xf32>
    %8 = vector.broadcast %7 : vector<1x800xf32> to vector<8x800xf32>
    %9 = arith.subf %0, %8 : vector<8x800xf32>
    %10 = vector.broadcast %7 : vector<1x800xf32> to vector<8x800xf32>
    %11 = arith.subf %0, %10 : vector<8x800xf32>
    %12 = arith.mulf %9, %11 : vector<8x800xf32>
    %cst_7 = arith.constant dense<0.000000e+00> : vector<800xf32>
    %13 = vector.multi_reduction <add>, %12, %cst_7 [0] : vector<8x800xf32> to vector<800xf32>
    %14 = vector.shape_cast %13 : vector<800xf32> to vector<1x800xf32>
    %cst_8 = arith.constant 8.000000e+00 : f32
    %15 = vector.broadcast %cst_8 : f32 to vector<1x800xf32>
    %16 = arith.divf %14, %15 : vector<1x800xf32>
    %17 = vector.broadcast %7 : vector<1x800xf32> to vector<8x800xf32>
    %18 = arith.subf %0, %17 : vector<8x800xf32>
    %cst_9 = arith.constant 9.99999974E-6 : f32
    %19 = vector.broadcast %cst_9 : f32 to vector<1x800xf32>
    %20 = arith.addf %16, %19 : vector<1x800xf32>
    %21 = math.rsqrt %20 : vector<1x800xf32>
    %22 = vector.broadcast %21 : vector<1x800xf32> to vector<8x800xf32>
    %23 = arith.mulf %18, %22 : vector<8x800xf32>
    %24 = vector.broadcast %2 : vector<1x800xf32> to vector<8x800xf32>
    %25 = arith.mulf %23, %24 : vector<8x800xf32>
    %26 = vector.broadcast %3 : vector<1x800xf32> to vector<8x800xf32>
    %27 = arith.addf %25, %26 : vector<8x800xf32>
    %cst_10 = arith.constant 0.000000e+00 : f32
    %28 = vector.broadcast %cst_10 : f32 to vector<8x800xf32>
    %29 = arith.maximumf %27, %28 : vector<8x800xf32>
    %c0_11 = arith.constant 0 : index
    %c0_12 = arith.constant 0 : index
    %30 = vector.load %arg2[%c0_11, %c0_12] : memref<800x8xf32, #tpu.memory_space<vmem>>, vector<800x8xf32>
    %cst_13 = arith.constant dense<0.000000e+00> : vector<8x8xf32>
    %31 = tpu.matmul %29, %30, %cst_13 {dimension_numbers = #tpu.dot_dimension_numbers<[1], [0], [0], [1], [0, 0, 1, 1], [], []>} : vector<8x800xf32>, vector<800x8xf32>, vector<8x8xf32> -> vector<8x8xf32>
    %c0_14 = arith.constant 0 : index
    %c1792 = arith.constant 1792 : index
    %32 = vector.load %arg1[%c0_14, %c1792] : memref<1x3200xf32, #tpu.memory_space<vmem>>, vector<1x8xf32>
    %33 = vector.broadcast %32 : vector<1x8xf32> to vector<8x8xf32>
    %34 = arith.addf %31, %33 : vector<8x8xf32>
    %c0_15 = arith.constant 0 : index
    %c2944 = arith.constant 2944 : index
    %35 = vector.load %arg1[%c0_15, %c2944] : memref<1x3200xf32, #tpu.memory_space<vmem>>, vector<1x3xf32>
    %36 = vector.broadcast %35 : vector<1x3xf32> to vector<8x3xf32>
    %37 = arith.subf %1, %36 : vector<8x3xf32>
    %c0_16 = arith.constant 0 : index
    %c3072 = arith.constant 3072 : index
    %38 = vector.load %arg1[%c0_16, %c3072] : memref<1x3200xf32, #tpu.memory_space<vmem>>, vector<1x3xf32>
    %39 = vector.broadcast %38 : vector<1x3xf32> to vector<8x3xf32>
    %40 = arith.mulf %37, %39 : vector<8x3xf32>
    %c0_17 = arith.constant 0 : index
    %c1920 = arith.constant 1920 : index
    %41 = vector.load %arg1[%c0_17, %c1920] : memref<1x3200xf32, #tpu.memory_space<vmem>>, vector<1x8xf32>
    %c0_18 = arith.constant 0 : index
    %c2048 = arith.constant 2048 : index
    %42 = vector.load %arg1[%c0_18, %c2048] : memref<1x3200xf32, #tpu.memory_space<vmem>>, vector<1x8xf32>
    %cst_19 = arith.constant dense<0.000000e+00> : vector<8xf32>
    %43 = vector.multi_reduction <add>, %34, %cst_19 [0] : vector<8x8xf32> to vector<8xf32>
    %44 = vector.shape_cast %43 : vector<8xf32> to vector<1x8xf32>
    %cst_20 = arith.constant 8.000000e+00 : f32
    %45 = vector.broadcast %cst_20 : f32 to vector<1x8xf32>
    %46 = arith.divf %44, %45 : vector<1x8xf32>
    %47 = vector.broadcast %46 : vector<1x8xf32> to vector<8x8xf32>
    %48 = arith.subf %34, %47 : vector<8x8xf32>
    %49 = vector.broadcast %46 : vector<1x8xf32> to vector<8x8xf32>
    %50 = arith.subf %34, %49 : vector<8x8xf32>
    %51 = arith.mulf %48, %50 : vector<8x8xf32>
    %cst_21 = arith.constant dense<0.000000e+00> : vector<8xf32>
    %52 = vector.multi_reduction <add>, %51, %cst_21 [0] : vector<8x8xf32> to vector<8xf32>
    %53 = vector.shape_cast %52 : vector<8xf32> to vector<1x8xf32>
    %cst_22 = arith.constant 8.000000e+00 : f32
    %54 = vector.broadcast %cst_22 : f32 to vector<1x8xf32>
    %55 = arith.divf %53, %54 : vector<1x8xf32>
    %56 = vector.broadcast %46 : vector<1x8xf32> to vector<8x8xf32>
    %57 = arith.subf %34, %56 : vector<8x8xf32>
    %cst_23 = arith.constant 9.99999974E-6 : f32
    %58 = vector.broadcast %cst_23 : f32 to vector<1x8xf32>
    %59 = arith.addf %55, %58 : vector<1x8xf32>
    %60 = math.rsqrt %59 : vector<1x8xf32>
    %61 = vector.broadcast %60 : vector<1x8xf32> to vector<8x8xf32>
    %62 = arith.mulf %57, %61 : vector<8x8xf32>
    %63 = vector.broadcast %41 : vector<1x8xf32> to vector<8x8xf32>
    %64 = arith.mulf %62, %63 : vector<8x8xf32>
    %65 = vector.broadcast %42 : vector<1x8xf32> to vector<8x8xf32>
    %66 = arith.addf %64, %65 : vector<8x8xf32>
    %cst_24 = arith.constant 0.000000e+00 : f32
    %67 = vector.broadcast %cst_24 : f32 to vector<8x8xf32>
    %68 = arith.maximumf %66, %67 : vector<8x8xf32>
    %c0_25 = arith.constant 0 : index
    %c2176 = arith.constant 2176 : index
    %69 = vector.load %arg1[%c0_25, %c2176] : memref<1x3200xf32, #tpu.memory_space<vmem>>, vector<1x3xf32>
    %c0_26 = arith.constant 0 : index
    %c2304 = arith.constant 2304 : index
    %70 = vector.load %arg1[%c0_26, %c2304] : memref<1x3200xf32, #tpu.memory_space<vmem>>, vector<1x3xf32>
    %cst_27 = arith.constant dense<0.000000e+00> : vector<3xf32>
    %71 = vector.multi_reduction <add>, %40, %cst_27 [0] : vector<8x3xf32> to vector<3xf32>
    %72 = vector.shape_cast %71 : vector<3xf32> to vector<1x3xf32>
    %cst_28 = arith.constant 8.000000e+00 : f32
    %73 = vector.broadcast %cst_28 : f32 to vector<1x3xf32>
    %74 = arith.divf %72, %73 : vector<1x3xf32>
    %75 = vector.broadcast %74 : vector<1x3xf32> to vector<8x3xf32>
    %76 = arith.subf %40, %75 : vector<8x3xf32>
    %77 = vector.broadcast %74 : vector<1x3xf32> to vector<8x3xf32>
    %78 = arith.subf %40, %77 : vector<8x3xf32>
    %79 = arith.mulf %76, %78 : vector<8x3xf32>
    %cst_29 = arith.constant dense<0.000000e+00> : vector<3xf32>
    %80 = vector.multi_reduction <add>, %79, %cst_29 [0] : vector<8x3xf32> to vector<3xf32>
    %81 = vector.shape_cast %80 : vector<3xf32> to vector<1x3xf32>
    %cst_30 = arith.constant 8.000000e+00 : f32
    %82 = vector.broadcast %cst_30 : f32 to vector<1x3xf32>
    %83 = arith.divf %81, %82 : vector<1x3xf32>
    %84 = vector.broadcast %74 : vector<1x3xf32> to vector<8x3xf32>
    %85 = arith.subf %40, %84 : vector<8x3xf32>
    %cst_31 = arith.constant 9.99999974E-6 : f32
    %86 = vector.broadcast %cst_31 : f32 to vector<1x3xf32>
    %87 = arith.addf %83, %86 : vector<1x3xf32>
    %88 = math.rsqrt %87 : vector<1x3xf32>
    %89 = vector.broadcast %88 : vector<1x3xf32> to vector<8x3xf32>
    %90 = arith.mulf %85, %89 : vector<8x3xf32>
    %91 = vector.broadcast %69 : vector<1x3xf32> to vector<8x3xf32>
    %92 = arith.mulf %90, %91 : vector<8x3xf32>
    %93 = vector.broadcast %70 : vector<1x3xf32> to vector<8x3xf32>
    %94 = arith.addf %92, %93 : vector<8x3xf32>
    %cst_32 = arith.constant 0.000000e+00 : f32
    %95 = vector.broadcast %cst_32 : f32 to vector<8x3xf32>
    %96 = arith.maximumf %94, %95 : vector<8x3xf32>
    %c0_33 = arith.constant 0 : index
    %c0_34 = arith.constant 0 : index
    %97 = vector.load %arg3[%c0_33, %c0_34] : memref<48x32xf32, #tpu.memory_space<vmem>>, vector<8x32xf32>
    %c8 = arith.constant 8 : index
    %c0_35 = arith.constant 0 : index
    %98 = vector.load %arg3[%c8, %c0_35] : memref<48x32xf32, #tpu.memory_space<vmem>>, vector<3x32xf32>
    %cst_36 = arith.constant dense<0.000000e+00> : vector<8x32xf32>
    %99 = tpu.matmul %68, %97, %cst_36 {dimension_numbers = #tpu.dot_dimension_numbers<[1], [0], [0], [1], [0, 0, 1, 1], [], []>} : vector<8x8xf32>, vector<8x32xf32>, vector<8x32xf32> -> vector<8x32xf32>
    %cst_37 = arith.constant dense<0.000000e+00> : vector<8x32xf32>
    %100 = tpu.matmul %96, %98, %cst_37 {dimension_numbers = #tpu.dot_dimension_numbers<[1], [0], [0], [1], [0, 0, 1, 1], [], []>} : vector<8x3xf32>, vector<3x32xf32>, vector<8x32xf32> -> vector<8x32xf32>
    %101 = arith.addf %99, %100 : vector<8x32xf32>
    %c0_38 = arith.constant 0 : index
    %c2432 = arith.constant 2432 : index
    %102 = vector.load %arg1[%c0_38, %c2432] : memref<1x3200xf32, #tpu.memory_space<vmem>>, vector<1x32xf32>
    %103 = vector.broadcast %102 : vector<1x32xf32> to vector<8x32xf32>
    %104 = arith.addf %101, %103 : vector<8x32xf32>
    %c0_39 = arith.constant 0 : index
    %c2560 = arith.constant 2560 : index
    %105 = vector.load %arg1[%c0_39, %c2560] : memref<1x3200xf32, #tpu.memory_space<vmem>>, vector<1x32xf32>
    %c0_40 = arith.constant 0 : index
    %c2688 = arith.constant 2688 : index
    %106 = vector.load %arg1[%c0_40, %c2688] : memref<1x3200xf32, #tpu.memory_space<vmem>>, vector<1x32xf32>
    %cst_41 = arith.constant dense<0.000000e+00> : vector<32xf32>
    %107 = vector.multi_reduction <add>, %104, %cst_41 [0] : vector<8x32xf32> to vector<32xf32>
    %108 = vector.shape_cast %107 : vector<32xf32> to vector<1x32xf32>
    %cst_42 = arith.constant 8.000000e+00 : f32
    %109 = vector.broadcast %cst_42 : f32 to vector<1x32xf32>
    %110 = arith.divf %108, %109 : vector<1x32xf32>
    %111 = vector.broadcast %110 : vector<1x32xf32> to vector<8x32xf32>
    %112 = arith.subf %104, %111 : vector<8x32xf32>
    %113 = vector.broadcast %110 : vector<1x32xf32> to vector<8x32xf32>
    %114 = arith.subf %104, %113 : vector<8x32xf32>
    %115 = arith.mulf %112, %114 : vector<8x32xf32>
    %cst_43 = arith.constant dense<0.000000e+00> : vector<32xf32>
    %116 = vector.multi_reduction <add>, %115, %cst_43 [0] : vector<8x32xf32> to vector<32xf32>
    %117 = vector.shape_cast %116 : vector<32xf32> to vector<1x32xf32>
    %cst_44 = arith.constant 8.000000e+00 : f32
    %118 = vector.broadcast %cst_44 : f32 to vector<1x32xf32>
    %119 = arith.divf %117, %118 : vector<1x32xf32>
    %120 = vector.broadcast %110 : vector<1x32xf32> to vector<8x32xf32>
    %121 = arith.subf %104, %120 : vector<8x32xf32>
    %cst_45 = arith.constant 9.99999974E-6 : f32
    %122 = vector.broadcast %cst_45 : f32 to vector<1x32xf32>
    %123 = arith.addf %119, %122 : vector<1x32xf32>
    %124 = math.rsqrt %123 : vector<1x32xf32>
    %125 = vector.broadcast %124 : vector<1x32xf32> to vector<8x32xf32>
    %126 = arith.mulf %121, %125 : vector<8x32xf32>
    %127 = vector.broadcast %105 : vector<1x32xf32> to vector<8x32xf32>
    %128 = arith.mulf %126, %127 : vector<8x32xf32>
    %129 = vector.broadcast %106 : vector<1x32xf32> to vector<8x32xf32>
    %130 = arith.addf %128, %129 : vector<8x32xf32>
    %cst_46 = arith.constant 0.000000e+00 : f32
    %131 = vector.broadcast %cst_46 : f32 to vector<8x32xf32>
    %132 = arith.maximumf %130, %131 : vector<8x32xf32>
    %c16 = arith.constant 16 : index
    %c0_47 = arith.constant 0 : index
    %133 = vector.load %arg3[%c16, %c0_47] : memref<48x32xf32, #tpu.memory_space<vmem>>, vector<32x2xf32>
    %cst_48 = arith.constant dense<0.000000e+00> : vector<8x2xf32>
    %134 = tpu.matmul %132, %133, %cst_48 {dimension_numbers = #tpu.dot_dimension_numbers<[1], [0], [0], [1], [0, 0, 1, 1], [], []>} : vector<8x32xf32>, vector<32x2xf32>, vector<8x2xf32> -> vector<8x2xf32>
    %c0_49 = arith.constant 0 : index
    %c2816 = arith.constant 2816 : index
    %135 = vector.load %arg1[%c0_49, %c2816] : memref<1x3200xf32, #tpu.memory_space<vmem>>, vector<1x2xf32>
    %136 = vector.broadcast %135 : vector<1x2xf32> to vector<8x2xf32>
    %137 = arith.addf %134, %136 : vector<8x2xf32>
    %cst_50 = arith.constant dense<0xFF800000> : vector<8xf32>
    %138 = vector.multi_reduction <maximumf>, %137, %cst_50 [1] : vector<8x2xf32> to vector<8xf32>
    %139 = vector.shape_cast %138 : vector<8xf32> to vector<8x1xf32>
    %140 = vector.broadcast %139 : vector<8x1xf32> to vector<8x2xf32>
    %141 = arith.subf %137, %140 : vector<8x2xf32>
    %142 = math.exp %141 : vector<8x2xf32>
    %cst_51 = arith.constant dense<0.000000e+00> : vector<8xf32>
    %143 = vector.multi_reduction <add>, %142, %cst_51 [1] : vector<8x2xf32> to vector<8xf32>
    %144 = vector.shape_cast %143 : vector<8xf32> to vector<8x1xf32>
    %145 = vector.broadcast %144 : vector<8x1xf32> to vector<8x2xf32>
    %146 = arith.divf %142, %145 : vector<8x2xf32>
    %c0_52 = arith.constant 0 : index
    %c0_53 = arith.constant 0 : index
    %147 = vector.load %arg4[%c0_52, %c0_53] : memref<8x2xf32, #tpu.memory_space<vmem>>, vector<8x2xf32>
    tpu.vector_store %arg4[%c0_52, %c0_53], %146 {strides = array<i32>} : memref<8x2xf32, #tpu.memory_space<vmem>>, vector<8x2xf32>,
    return
  }
}

</mosaic_0001>

<llo_original>
// kernel: forward.1
$region0: #{forward.1}
  #allocation0 [shape = 'u32[]', space=smem, size = 0x4, offset = 0x4, fixed_abs, tag = 'smem constant byte address 0x4 - core index']
  #allocation1 [shape = 'u32[144,128]{1,0:T(1,128)}', space=vmem, size = 0x12000, scoped, tag = 'internal scratch']
  %s0 = inlined_call_operand.vmem [shape: f32[8,1024], index: 0, kind: input, shape index: {}]
  %s1 = inlined_call_operand.vmem [shape: f32[1,3200], index: 1, kind: input, shape index: {}]
  %s2 = inlined_call_operand.vmem [shape: f32[800,8], index: 2, kind: input, shape index: {}]
  %s3 = inlined_call_operand.vmem [shape: f32[48,32], index: 3, kind: input, shape index: {}]
  %s4 = inlined_call_operand.vmem [shape: f32[8,2], index: 4, kind: output, shape index: {}]
  %s5 = sld [smem:[#allocation0]]
  $region26: #{forward.1} parent=0
    _
  %s7 = ssub.s32 1, %s5
  %s8 = scalar_select 0, %s7, %s5
  // Predicated region
  $region2: #{forward.1} parent=0 // pred_check
    _
  $region3: #{forward.1} parent=0 // pred_check_branch
    %10 = sbr.rel (0) target = $region5
  $region4: #{forward.1} parent=0 // pred_region
    _
  $region5: #{forward.1} parent=0 // pred_fallthru
    _
  // Predicated region
  $region6: #{forward.1} parent=0 // pred_check
    _
  $region7: #{forward.1} parent=0 // pred_check_branch
    %12 = sbr.rel (0) target = $region9
  $region8: #{forward.1} parent=0 // pred_region
    _
  $region9: #{forward.1} parent=0 // pred_fallthru
    _
  // Predicated region
  $region10: #{forward.1} parent=0 // pred_check
    _
  $region11: #{forward.1} parent=0 // pred_check_branch
    %14 = sbr.rel (0) target = $region13
  $region12: #{forward.1} parent=0 // pred_region
    _
  $region13: #{forward.1} parent=0 // pred_fallthru
    _
  // Predicated region
  $region14: #{forward.1} parent=0 // pred_check
    _
  $region15: #{forward.1} parent=0 // pred_check_branch
    %16 = sbr.rel (0) target = $region17
  $region16: #{forward.1} parent=0 // pred_region
    _
  $region17: #{forward.1} parent=0 // pred_fallthru
    _
  %v17 = vld [vmem:[%s0] sm:$0xff]
  %v18 = vld [vmem:[%s0 + $0x8] sm:$0xff]
  %v19 = vld [vmem:[%s0 + $0x10] sm:$0xff]
  %v20 = vld [vmem:[%s0 + $0x18] sm:$0xff]
  %v21 = vld [vmem:[%s0 + $0x20] sm:$0xff]
  %v22 = vld [vmem:[%s0 + $0x28] sm:$0xff]
  %v23 = vld [vmem:[%s0 + $0x30] sm:$0xff]
  %v24 = vld [vmem:[%s0 + $0x38] sm:$0xff]
  %v25 = vld [vmem:[%s1] sm:$0x7f]
  %v26 = vld [vmem:[%s1 + $0x7] sm:$0x7f]
  %v27 = vrot.slane %v17, 4
  %v28 = vadd.f32 %v17, %v27
  %v29 = vrot.slane %v28, 2
  %v30 = vadd.f32 %v28, %v29
  %v31 = vrot.slane %v30, 1
  %v32 = vadd.f32 %v30, %v31
  %v33 = vrot.slane %v18, 4
  %v34 = vadd.f32 %v18, %v33
  %v35 = vrot.slane %v34, 2
  %v36 = vadd.f32 %v34, %v35
  %v37 = vrot.slane %v36, 1
  %v38 = vadd.f32 %v36, %v37
  %v39 = vrot.slane %v19, 4
  %v40 = vadd.f32 %v19, %v39
  %v41 = vrot.slane %v40, 2
  %v42 = vadd.f32 %v40, %v41
  %v43 = vrot.slane %v42, 1
  %v44 = vadd.f32 %v42, %v43
  %v45 = vrot.slane %v20, 4
  %v46 = vadd.f32 %v20, %v45
  %v47 = vrot.slane %v46, 2
  %v48 = vadd.f32 %v46, %v47
  %v49 = vrot.slane %v48, 1
  %v50 = vadd.f32 %v48, %v49
  %v51 = vrot.slane %v21, 4
  %v52 = vadd.f32 %v21, %v51
  %v53 = vrot.slane %v52, 2
  %v54 = vadd.f32 %v52, %v53
  %v55 = vrot.slane %v54, 1
  %v56 = vadd.f32 %v54, %v55
  %v57 = vrot.slane %v22, 4
  %v58 = vadd.f32 %v22, %v57
  %v59 = vrot.slane %v58, 2
  %v60 = vadd.f32 %v58, %v59
  %v61 = vrot.slane %v60, 1
  %v62 = vadd.f32 %v60, %v61
  %vm63 = vcmask 261120
  %v64 = vsel %vm63, %v23, 0.0
  %v65 = vrot.slane %v64, 4
  %v66 = vadd.f32 %v64, %v65
  %v67 = vrot.slane %v66, 2
  %v68 = vadd.f32 %v66, %v67
  %v69 = vrot.slane %v68, 1
  %v70 = vadd.f32 %v68, %v69
  %v71 = vrcp.pop 8.0
  %v72 = vmul.f32 %v32, %v71
  %v73 = vmul.f32 %v38, %v71
  %v74 = vmul.f32 %v44, %v71
  %v75 = vmul.f32 %v50, %v71
  %v76 = vmul.f32 %v56, %v71
  %v77 = vmul.f32 %v62, %v71
  %v78 = vmul.f32 %v70, %v71
  %v79 = vsub.f32 %v17, %v72
  %v80 = vsub.f32 %v18, %v73
  %v81 = vsub.f32 %v19, %v74
  %v82 = vsub.f32 %v20, %v75
  %v83 = vsub.f32 %v21, %v76
  %v84 = vsub.f32 %v22, %v77
  %v85 = vsub.f32 %v23, %v78
  %v86 = vmul.f32 %v79, %v79
  %v87 = vmul.f32 %v80, %v80
  %v88 = vmul.f32 %v81, %v81
  %v89 = vmul.f32 %v82, %v82
  %v90 = vmul.f32 %v83, %v83
  %v91 = vmul.f32 %v84, %v84
  %v92 = vmul.f32 %v85, %v85
  %v93 = vrot.slane %v86, 4
  %v94 = vadd.f32 %v86, %v93
  %v95 = vrot.slane %v94, 2
  %v96 = vadd.f32 %v94, %v95
  %v97 = vrot.slane %v96, 1
  %v98 = vadd.f32 %v96, %v97
  %v99 = vrot.slane %v87, 4
  %v100 = vadd.f32 %v87, %v99
  %v101 = vrot.slane %v100, 2
  %v102 = vadd.f32 %v100, %v101
  %v103 = vrot.slane %v102, 1
  %v104 = vadd.f32 %v102, %v103
  %v105 = vrot.slane %v88, 4
  %v106 = vadd.f32 %v88, %v105
  %v107 = vrot.slane %v106, 2
  %v108 = vadd.f32 %v106, %v107
  %v109 = vrot.slane %v108, 1
  %v110 = vadd.f32 %v108, %v109
  %v111 = vrot.slane %v89, 4
  %v112 = vadd.f32 %v89, %v111
  %v113 = vrot.slane %v112, 2
  %v114 = vadd.f32 %v112, %v113
  %v115 = vrot.slane %v114, 1
  %v116 = vadd.f32 %v114, %v115
  %v117 = vrot.slane %v90, 4
  %v118 = vadd.f32 %v90, %v117
  %v119 = vrot.slane %v118, 2
  %v120 = vadd.f32 %v118, %v119
  %v121 = vrot.slane %v120, 1
  %v122 = vadd.f32 %v120, %v121
  %v123 = vrot.slane %v91, 4
  %v124 = vadd.f32 %v91, %v123
  %v125 = vrot.slane %v124, 2
  %v126 = vadd.f32 %v124, %v125
  %v127 = vrot.slane %v126, 1
  %v128 = vadd.f32 %v126, %v127
  %v129 = vsel %vm63, %v92, 0.0
  %v130 = vrot.slane %v129, 4
  %v131 = vadd.f32 %v129, %v130
  %v132 = vrot.slane %v131, 2
  %v133 = vadd.f32 %v131, %v132
  %v134 = vrot.slane %v133, 1
  %v135 = vadd.f32 %v133, %v134
  %v136 = vmul.f32 %v98, %v71
  %v137 = vmul.f32 %v104, %v71
  %v138 = vmul.f32 %v110, %v71
  %v139 = vmul.f32 %v116, %v71
  %v140 = vmul.f32 %v122, %v71
  %v141 = vmul.f32 %v128, %v71
  %v142 = vmul.f32 %v135, %v71
  %v143 = vadd.f32 %v136, 1e-05
  %v144 = vadd.f32 %v137, 1e-05
  %v145 = vadd.f32 %v138, 1e-05
  %v146 = vadd.f32 %v139, 1e-05
  %v147 = vadd.f32 %v140, 1e-05
  %v148 = vadd.f32 %v141, 1e-05
  %v149 = vadd.f32 %v142, 1e-05
  %v150 = vrsqrt.pop %v143
  %v151 = vrsqrt.pop %v144
  %v152 = vrsqrt.pop %v145
  %v153 = vrsqrt.pop %v146
  %v154 = vrsqrt.pop %v147
  %v155 = vrsqrt.pop %v148
  %v156 = vrsqrt.pop %v149
  %v157 = vmul.f32 %v79, %v150
  %v158 = vmul.f32 %v80, %v151
  %v159 = vmul.f32 %v81, %v152
  %v160 = vmul.f32 %v82, %v153
  %v161 = vmul.f32 %v83, %v154
  %v162 = vmul.f32 %v84, %v155
  %v163 = vmul.f32 %v85, %v156
  %v165 = vlaneseq
  %v166 = vshrl.u32 %v165, 7
  %v167 = vsub.s32 0, %v166
  %v168 = vrot.slane %v25, %v167
  %v169 = vlaneseq
  %v170 = vshrl.u32 %v169, 7
  %v171 = vsub.s32 1, %v170
  %v172 = vrot.slane %v25, %v171
  %v173 = vlaneseq
  %v174 = vshrl.u32 %v173, 7
  %v175 = vsub.s32 2, %v174
  %v176 = vrot.slane %v25, %v175
  %v177 = vlaneseq
  %v178 = vshrl.u32 %v177, 7
  %v179 = vsub.s32 3, %v178
  %v180 = vrot.slane %v25, %v179
  %v181 = vlaneseq
  %v182 = vshrl.u32 %v181, 7
  %v183 = vsub.s32 4, %v182
  %v184 = vrot.slane %v25, %v183
  %v185 = vlaneseq
  %v186 = vshrl.u32 %v185, 7
  %v187 = vsub.s32 5, %v186
  %v188 = vrot.slane %v25, %v187
  %v189 = vlaneseq
  %v190 = vshrl.u32 %v189, 7
  %v191 = vsub.s32 6, %v190
  %v192 = vrot.slane %v25, %v191
  %v200 = vmul.f32 %v157, %v168
  %v201 = vmul.f32 %v158, %v172
  %v202 = vmul.f32 %v159, %v176
  %v203 = vmul.f32 %v160, %v180
  %v204 = vmul.f32 %v161, %v184
  %v205 = vmul.f32 %v162, %v188
  %v206 = vmul.f32 %v163, %v192
  %v208 = vlaneseq
  %v209 = vshrl.u32 %v208, 7
  %v210 = vsub.s32 0, %v209
  %v211 = vrot.slane %v26, %v210
  %v212 = vlaneseq
  %v213 = vshrl.u32 %v212, 7
  %v214 = vsub.s32 1, %v213
  %v215 = vrot.slane %v26, %v214
  %v216 = vlaneseq
  %v217 = vshrl.u32 %v216, 7
  %v218 = vsub.s32 2, %v217
  %v219 = vrot.slane %v26, %v218
  %v220 = vlaneseq
  %v221 = vshrl.u32 %v220, 7
  %v222 = vsub.s32 3, %v221
  %v223 = vrot.slane %v26, %v222
  %v224 = vlaneseq
  %v225 = vshrl.u32 %v224, 7
  %v226 = vsub.s32 4, %v225
  %v227 = vrot.slane %v26, %v226
  %v228 = vlaneseq
  %v229 = vshrl.u32 %v228, 7
  %v230 = vsub.s32 5, %v229
  %v231 = vrot.slane %v26, %v230
  %v232 = vlaneseq
  %v233 = vshrl.u32 %v232, 7
  %v234 = vsub.s32 6, %v233
  %v235 = vrot.slane %v26, %v234
  %v243 = vadd.f32 %v200, %v211
  %v244 = vadd.f32 %v201, %v215
  %v245 = vadd.f32 %v202, %v219
  %v246 = vadd.f32 %v203, %v223
  %v247 = vadd.f32 %v204, %v227
  %v248 = vadd.f32 %v205, %v231
  %v249 = vadd.f32 %v206, %v235
  %v250 = vmax.f32 %v243, 0.0
  %v251 = vmax.f32 %v244, 0.0
  %v252 = vmax.f32 %v245, 0.0
  %v253 = vmax.f32 %v246, 0.0
  %v254 = vmax.f32 %v247, 0.0
  %v255 = vmax.f32 %v248, 0.0
  %v256 = vmax.f32 %v249, 0.0
  %v257 = vld [vmem:[%s2] sm:$0xff]
  %v258 = vld [vmem:[%s2 + $0x8] sm:$0xff]
  %v259 = vld [vmem:[%s2 + $0x10] sm:$0xff]
  %v260 = vld [vmem:[%s2 + $0x18] sm:$0xff]
  %v261 = vld [vmem:[%s2 + $0x20] sm:$0xff]
  %v262 = vld [vmem:[%s2 + $0x28] sm:$0xff]
  %v263 = vld [vmem:[%s2 + $0x30] sm:$0xff]
  %v264 = vld [vmem:[%s2 + $0x38] sm:$0xff]
  %v265 = vld [vmem:[%s2 + $0x40] sm:$0xff]
  %v266 = vld [vmem:[%s2 + $0x48] sm:$0xff]
  %v267 = vld [vmem:[%s2 + $0x50] sm:$0xff]
  %v268 = vld [vmem:[%s2 + $0x58] sm:$0xff]
  %v269 = vld [vmem:[%s2 + $0x60] sm:$0xff]
  %v270 = vld [vmem:[%s2 + $0x68] sm:$0xff]
  %v271 = vld [vmem:[%s2 + $0x70] sm:$0xff]
  %v272 = vld [vmem:[%s2 + $0x78] sm:$0xff]
  %v273 = vld [vmem:[%s2 + $0x80] sm:$0xff]
  %v274 = vld [vmem:[%s2 + $0x88] sm:$0xff]
  %v275 = vld [vmem:[%s2 + $0x90] sm:$0xff]
  %v276 = vld [vmem:[%s2 + $0x98] sm:$0xff]
  %v277 = vld [vmem:[%s2 + $0xa0] sm:$0xff]
  %v278 = vld [vmem:[%s2 + $0xa8] sm:$0xff]
  %v279 = vld [vmem:[%s2 + $0xb0] sm:$0xff]
  %v280 = vld [vmem:[%s2 + $0xb8] sm:$0xff]
  %v281 = vld [vmem:[%s2 + $0xc0] sm:$0xff]
  %v282 = vld [vmem:[%s2 + $0xc8] sm:$0xff]
  %v283 = vld [vmem:[%s2 + $0xd0] sm:$0xff]
  %v284 = vld [vmem:[%s2 + $0xd8] sm:$0xff]
  %v285 = vld [vmem:[%s2 + $0xe0] sm:$0xff]
  %v286 = vld [vmem:[%s2 + $0xe8] sm:$0xff]
  %v287 = vld [vmem:[%s2 + $0xf0] sm:$0xff]
  %v288 = vld [vmem:[%s2 + $0xf8] sm:$0xff]
  %v289 = vld [vmem:[%s2 + $0x100] sm:$0xff]
  %v290 = vld [vmem:[%s2 + $0x108] sm:$0xff]
  %v291 = vld [vmem:[%s2 + $0x110] sm:$0xff]
  %v292 = vld [vmem:[%s2 + $0x118] sm:$0xff]
  %v293 = vld [vmem:[%s2 + $0x120] sm:$0xff]
  %v294 = vld [vmem:[%s2 + $0x128] sm:$0xff]
  %v295 = vld [vmem:[%s2 + $0x130] sm:$0xff]
  %v296 = vld [vmem:[%s2 + $0x138] sm:$0xff]
  %v297 = vld [vmem:[%s2 + $0x140] sm:$0xff]
  %v298 = vld [vmem:[%s2 + $0x148] sm:$0xff]
  %v299 = vld [vmem:[%s2 + $0x150] sm:$0xff]
  %v300 = vld [vmem:[%s2 + $0x158] sm:$0xff]
  %v301 = vld [vmem:[%s2 + $0x160] sm:$0xff]
  %v302 = vld [vmem:[%s2 + $0x168] sm:$0xff]
  %v303 = vld [vmem:[%s2 + $0x170] sm:$0xff]
  %v304 = vld [vmem:[%s2 + $0x178] sm:$0xff]
  %v305 = vld [vmem:[%s2 + $0x180] sm:$0xff]
  %v306 = vld [vmem:[%s2 + $0x188] sm:$0xff]
  %v307 = vld [vmem:[%s2 + $0x190] sm:$0xff]
  %v308 = vld [vmem:[%s2 + $0x198] sm:$0xff]
  %v309 = vld [vmem:[%s2 + $0x1a0] sm:$0xff]
  %v310 = vld [vmem:[%s2 + $0x1a8] sm:$0xff]
  %v311 = vld [vmem:[%s2 + $0x1b0] sm:$0xff]
  %v312 = vld [vmem:[%s2 + $0x1b8] sm:$0xff]
  %v313 = vld [vmem:[%s2 + $0x1c0] sm:$0xff]
  %v314 = vld [vmem:[%s2 + $0x1c8] sm:$0xff]
  %v315 = vld [vmem:[%s2 + $0x1d0] sm:$0xff]
  %v316 = vld [vmem:[%s2 + $0x1d8] sm:$0xff]
  %v317 = vld [vmem:[%s2 + $0x1e0] sm:$0xff]
  %v318 = vld [vmem:[%s2 + $0x1e8] sm:$0xff]
  %v319 = vld [vmem:[%s2 + $0x1f0] sm:$0xff]
  %v320 = vld [vmem:[%s2 + $0x1f8] sm:$0xff]
  %v321 = vld [vmem:[%s2 + $0x200] sm:$0xff]
  %v322 = vld [vmem:[%s2 + $0x208] sm:$0xff]
  %v323 = vld [vmem:[%s2 + $0x210] sm:$0xff]
  %v324 = vld [vmem:[%s2 + $0x218] sm:$0xff]
  %v325 = vld [vmem:[%s2 + $0x220] sm:$0xff]
  %v326 = vld [vmem:[%s2 + $0x228] sm:$0xff]
  %v327 = vld [vmem:[%s2 + $0x230] sm:$0xff]
  %v328 = vld [vmem:[%s2 + $0x238] sm:$0xff]
  %v329 = vld [vmem:[%s2 + $0x240] sm:$0xff]
  %v330 = vld [vmem:[%s2 + $0x248] sm:$0xff]
  %v331 = vld [vmem:[%s2 + $0x250] sm:$0xff]
  %v332 = vld [vmem:[%s2 + $0x258] sm:$0xff]
  %v333 = vld [vmem:[%s2 + $0x260] sm:$0xff]
  %v334 = vld [vmem:[%s2 + $0x268] sm:$0xff]
  %v335 = vld [vmem:[%s2 + $0x270] sm:$0xff]
  %v336 = vld [vmem:[%s2 + $0x278] sm:$0xff]
  %v337 = vld [vmem:[%s2 + $0x280] sm:$0xff]
  %v338 = vld [vmem:[%s2 + $0x288] sm:$0xff]
  %v339 = vld [vmem:[%s2 + $0x290] sm:$0xff]
  %v340 = vld [vmem:[%s2 + $0x298] sm:$0xff]
  %v341 = vld [vmem:[%s2 + $0x2a0] sm:$0xff]
  %v342 = vld [vmem:[%s2 + $0x2a8] sm:$0xff]
  %v343 = vld [vmem:[%s2 + $0x2b0] sm:$0xff]
  %v344 = vld [vmem:[%s2 + $0x2b8] sm:$0xff]
  %v345 = vld [vmem:[%s2 + $0x2c0] sm:$0xff]
  %v346 = vld [vmem:[%s2 + $0x2c8] sm:$0xff]
  %v347 = vld [vmem:[%s2 + $0x2d0] sm:$0xff]
  %v348 = vld [vmem:[%s2 + $0x2d8] sm:$0xff]
  %v349 = vld [vmem:[%s2 + $0x2e0] sm:$0xff]
  %v350 = vld [vmem:[%s2 + $0x2e8] sm:$0xff]
  %v351 = vld [vmem:[%s2 + $0x2f0] sm:$0xff]
  %v352 = vld [vmem:[%s2 + $0x2f8] sm:$0xff]
  %v353 = vld [vmem:[%s2 + $0x300] sm:$0xff]
  %v354 = vld [vmem:[%s2 + $0x308] sm:$0xff]
  %v355 = vld [vmem:[%s2 + $0x310] sm:$0xff]
  %v356 = vld [vmem:[%s2 + $0x318] sm:$0xff]
  %v357 = vld [vmem:[%s1 + $0xe] sm:$0x1]
  %v359 = vlaneseq
  %v360 = vshrl.u32 %v359, 7
  %v361 = vsub.s32 0, %v360
  %v362 = vrot.slane %v357, %v361
  %v365 = vsel %vm63, %v256, 0
  %367 = vmatprep.subr.mxu0 0.0
  %368 = vmatpush1.msra.mxu0 %v257
  %369 = vmatprep.subr.mxu0 0.0
  %370 = vmatpush1.msra.mxu0 %v258
  %371 = vmatprep.subr.mxu0 0.0
  %372 = vmatpush1.msra.mxu0 %v259
  %373 = vmatprep.subr.mxu0 0.0
  %374 = vmatpush1.msra.mxu0 %v260
  %375 = vmatprep.subr.mxu0 0.0
  %376 = vmatpush1.msra.mxu0 %v261
  %377 = vmatprep.subr.mxu0 0.0
  %378 = vmatpush1.msra.mxu0 %v262
  %379 = vmatprep.subr.mxu0 0.0
  %380 = vmatpush1.msra.mxu0 %v263
  %381 = vmatprep.subr.mxu0 0.0
  %382 = vmatpush1.msra.mxu0 %v264
  %383 = vmatprep.subr.mxu0 0.0
  %384 = vmatpush1.msra.mxu0 %v265
  %385 = vmatprep.subr.mxu0 0.0
  %386 = vmatpush1.msra.mxu0 %v266
  %387 = vmatprep.subr.mxu0 0.0
  %388 = vmatpush1.msra.mxu0 %v267
  %389 = vmatprep.subr.mxu0 0.0
  %390 = vmatpush1.msra.mxu0 %v268
  %391 = vmatprep.subr.mxu0 0.0
  %392 = vmatpush1.msra.mxu0 %v269
  %393 = vmatprep.subr.mxu0 0.0
  %394 = vmatpush1.msra.mxu0 %v270
  %395 = vmatprep.subr.mxu0 0.0
  %396 = vmatpush1.msra.mxu0 %v271
  %397 = vmatprep.subr.mxu0 0.0
  %398 = vmatpush1.msra.mxu0 %v272
  %399 = vmatprep.subr.mxu0 0.0
  %400 = vmatpush1.msra.mxu0 %v273
  %401 = vmatprep.subr.mxu0 0.0
  %402 = vmatpush1.msra.mxu0 %v274
  %403 = vmatprep.subr.mxu0 0.0
  %404 = vmatpush1.msra.mxu0 %v275
  %405 = vmatprep.subr.mxu0 0.0
  %406 = vmatpush1.msra.mxu0 %v276
  %407 = vmatprep.subr.mxu0 0.0
  %408 = vmatpush1.msra.mxu0 %v277
  %409 = vmatprep.subr.mxu0 0.0
  %410 = vmatpush1.msra.mxu0 %v278
  %411 = vmatprep.subr.mxu0 0.0
  %412 = vmatpush1.msra.mxu0 %v279
  %413 = vmatprep.subr.mxu0 0.0
  %414 = vmatpush1.msra.mxu0 %v280
  %415 = vmatprep.subr.mxu0 0.0
  %416 = vmatpush1.msra.mxu0 %v281
  %417 = vmatprep.subr.mxu0 0.0
  %418 = vmatpush1.msra.mxu0 %v282
  %419 = vmatprep.subr.mxu0 0.0
  %420 = vmatpush1.msra.mxu0 %v283
  %421 = vmatprep.subr.mxu0 0.0
  %422 = vmatpush1.msra.mxu0 %v284
  %423 = vmatprep.subr.mxu0 0.0
  %424 = vmatpush1.msra.mxu0 %v285
  %425 = vmatprep.subr.mxu0 0.0
  %426 = vmatpush1.msra.mxu0 %v286
  %427 = vmatprep.subr.mxu0 0.0
  %428 = vmatpush1.msra.mxu0 %v287
  %429 = vmatprep.subr.mxu0 0.0
  %430 = vmatpush1.msra.mxu0 %v288
  %431 = vmatprep.mubr.f32.mxu0 %v251
  %432 = vmatmul.mubr.f32.gmra.mrb[0].mxu0 %v250
  %v433 = vpop.f32.mrb[0].mxu0
  %v434 = vadd.f32 %v362, %v433
  %v435 = vpop.f32.mrb[0].mxu0
  %436 = vdwg.mxu0
  %437 = vmatprep.subr.mxu0 0.0
  %438 = vmatpush1.msra.mxu0 %v289
  %439 = vmatprep.subr.mxu0 0.0
  %440 = vmatpush1.msra.mxu0 %v290
  %441 = vmatprep.subr.mxu0 0.0
  %442 = vmatpush1.msra.mxu0 %v291
  %443 = vmatprep.subr.mxu0 0.0
  %444 = vmatpush1.msra.mxu0 %v292
  %445 = vmatprep.subr.mxu0 0.0
  %446 = vmatpush1.msra.mxu0 %v293
  %447 = vmatprep.subr.mxu0 0.0
  %448 = vmatpush1.msra.mxu0 %v294
  %449 = vmatprep.subr.mxu0 0.0
  %450 = vmatpush1.msra.mxu0 %v295
  %451 = vmatprep.subr.mxu0 0.0
  %452 = vmatpush1.msra.mxu0 %v296
  %453 = vmatprep.subr.mxu0 0.0
  %454 = vmatpush1.msra.mxu0 %v297
  %455 = vmatprep.subr.mxu0 0.0
  %456 = vmatpush1.msra.mxu0 %v298
  %457 = vmatprep.subr.mxu0 0.0
  %458 = vmatpush1.msra.mxu0 %v299
  %459 = vmatprep.subr.mxu0 0.0
  %460 = vmatpush1.msra.mxu0 %v300
  %461 = vmatprep.subr.mxu0 0.0
  %462 = vmatpush1.msra.mxu0 %v301
  %463 = vmatprep.subr.mxu0 0.0
  %464 = vmatpush1.msra.mxu0 %v302
  %465 = vmatprep.subr.mxu0 0.0
  %466 = vmatpush1.msra.mxu0 %v303
  %467 = vmatprep.subr.mxu0 0.0
  %468 = vmatpush1.msra.mxu0 %v304
  %469 = vmatprep.subr.mxu0 0.0
  %470 = vmatpush1.msra.mxu0 %v305
  %471 = vmatprep.subr.mxu0 0.0
  %472 = vmatpush1.msra.mxu0 %v306
  %473 = vmatprep.subr.mxu0 0.0
  %474 = vmatpush1.msra.mxu0 %v307
  %475 = vmatprep.subr.mxu0 0.0
  %476 = vmatpush1.msra.mxu0 %v308
  %477 = vmatprep.subr.mxu0 0.0
  %478 = vmatpush1.msra.mxu0 %v309
  %479 = vmatprep.subr.mxu0 0.0
  %480 = vmatpush1.msra.mxu0 %v310
  %481 = vmatprep.subr.mxu0 0.0
  %482 = vmatpush1.msra.mxu0 %v311
  %483 = vmatprep.subr.mxu0 0.0
  %484 = vmatpush1.msra.mxu0 %v312
  %485 = vmatprep.subr.mxu0 0.0
  %486 = vmatpush1.msra.mxu0 %v313
  %487 = vmatprep.subr.mxu0 0.0
  %488 = vmatpush1.msra.mxu0 %v314
  %489 = vmatprep.subr.mxu0 0.0
  %490 = vmatpush1.msra.mxu0 %v315
  %491 = vmatprep.subr.mxu0 0.0
  %492 = vmatpush1.msra.mxu0 %v316
  %493 = vmatprep.subr.mxu0 0.0
  %494 = vmatpush1.msra.mxu0 %v317
  %495 = vmatprep.subr.mxu0 0.0
  %496 = vmatpush1.msra.mxu0 %v318
  %497 = vmatprep.subr.mxu0 0.0
  %498 = vmatpush1.msra.mxu0 %v319
  %499 = vmatprep.subr.mxu0 0.0
  %500 = vmatpush1.msra.mxu0 %v320
  %501 = vmatprep.mubr.f32.mxu0 %v253
  %502 = vmatmul.mubr.f32.gmra.mrb[0].mxu0 %v252
  %v503 = vpop.f32.mrb[0].mxu0
  %v504 = vadd.f32 %v434, %v503
  %v505 = vpop.f32.mrb[0].mxu0
  %506 = vdwg.mxu0
  %507 = vmatprep.subr.mxu0 0.0
  %508 = vmatpush1.msra.mxu0 %v321
  %509 = vmatprep.subr.mxu0 0.0
  %510 = vmatpush1.msra.mxu0 %v322
  %511 = vmatprep.subr.mxu0 0.0
  %512 = vmatpush1.msra.mxu0 %v323
  %513 = vmatprep.subr.mxu0 0.0
  %514 = vmatpush1.msra.mxu0 %v324
  %515 = vmatprep.subr.mxu0 0.0
  %516 = vmatpush1.msra.mxu0 %v325
  %517 = vmatprep.subr.mxu0 0.0
  %518 = vmatpush1.msra.mxu0 %v326
  %519 = vmatprep.subr.mxu0 0.0
  %520 = vmatpush1.msra.mxu0 %v327
  %521 = vmatprep.subr.mxu0 0.0
  %522 = vmatpush1.msra.mxu0 %v328
  %523 = vmatprep.subr.mxu0 0.0
  %524 = vmatpush1.msra.mxu0 %v329
  %525 = vmatprep.subr.mxu0 0.0
  %526 = vmatpush1.msra.mxu0 %v330
  %527 = vmatprep.subr.mxu0 0.0
  %528 = vmatpush1.msra.mxu0 %v331
  %529 = vmatprep.subr.mxu0 0.0
  %530 = vmatpush1.msra.mxu0 %v332
  %531 = vmatprep.subr.mxu0 0.0
  %532 = vmatpush1.msra.mxu0 %v333
  %533 = vmatprep.subr.mxu0 0.0
  %534 = vmatpush1.msra.mxu0 %v334
  %535 = vmatprep.subr.mxu0 0.0
  %536 = vmatpush1.msra.mxu0 %v335
  %537 = vmatprep.subr.mxu0 0.0
  %538 = vmatpush1.msra.mxu0 %v336
  %539 = vmatprep.subr.mxu0 0.0
  %540 = vmatpush1.msra.mxu0 %v337
  %541 = vmatprep.subr.mxu0 0.0
  %542 = vmatpush1.msra.mxu0 %v338
  %543 = vmatprep.subr.mxu0 0.0
  %544 = vmatpush1.msra.mxu0 %v339
  %545 = vmatprep.subr.mxu0 0.0
  %546 = vmatpush1.msra.mxu0 %v340
  %547 = vmatprep.subr.mxu0 0.0
  %548 = vmatpush1.msra.mxu0 %v341
  %549 = vmatprep.subr.mxu0 0.0
  %550 = vmatpush1.msra.mxu0 %v342
  %551 = vmatprep.subr.mxu0 0.0
  %552 = vmatpush1.msra.mxu0 %v343
  %553 = vmatprep.subr.mxu0 0.0
  %554 = vmatpush1.msra.mxu0 %v344
  %555 = vmatprep.subr.mxu0 0.0
  %556 = vmatpush1.msra.mxu0 %v345
  %557 = vmatprep.subr.mxu0 0.0
  %558 = vmatpush1.msra.mxu0 %v346
  %559 = vmatprep.subr.mxu0 0.0
  %560 = vmatpush1.msra.mxu0 %v347
  %561 = vmatprep.subr.mxu0 0.0
  %562 = vmatpush1.msra.mxu0 %v348
  %563 = vmatprep.subr.mxu0 0.0
  %564 = vmatpush1.msra.mxu0 %v349
  %565 = vmatprep.subr.mxu0 0.0
  %566 = vmatpush1.msra.mxu0 %v350
  %567 = vmatprep.subr.mxu0 0.0
  %568 = vmatpush1.msra.mxu0 %v351
  %569 = vmatprep.subr.mxu0 0.0
  %570 = vmatpush1.msra.mxu0 %v352
  %571 = vmatprep.mubr.f32.mxu0 %v255
  %572 = vmatmul.mubr.f32.gmra.mrb[0].mxu0 %v254
  %v573 = vpop.f32.mrb[0].mxu0
  %v574 = vadd.f32 %v504, %v573
  %v575 = vpop.f32.mrb[0].mxu0
  %576 = vdwg.mxu0
  %577 = vmatprep.subr.mxu0 0.0
  %578 = vmatpush1.msra.mxu0 %v353
  %579 = vmatprep.subr.mxu0 0.0
  %580 = vmatpush1.msra.mxu0 %v354
  %581 = vmatprep.subr.mxu0 0.0
  %582 = vmatpush1.msra.mxu0 %v355
  %583 = vmatprep.subr.mxu0 0.0
  %584 = vmatpush1.msra.mxu0 %v356
  %585 = vmatprep.subr.mxu0 0.0
  %586 = vmatpush1.msra.mxu0 0.0
  %587 = vmatprep.subr.mxu0 0.0
  %588 = vmatpush1.msra.mxu0 0.0
  %589 = vmatprep.subr.mxu0 0.0
  %590 = vmatpush1.msra.mxu0 0.0
  %591 = vmatprep.subr.mxu0 0.0
  %592 = vmatpush1.msra.mxu0 0.0
  %593 = vmatprep.subr.mxu0 0.0
  %594 = vmatpush1.msra.mxu0 0.0
  %595 = vmatprep.subr.mxu0 0.0
  %596 = vmatpush1.msra.mxu0 0.0
  %597 = vmatprep.subr.mxu0 0.0
  %598 = vmatpush1.msra.mxu0 0.0
  %599 = vmatprep.subr.mxu0 0.0
  %600 = vmatpush1.msra.mxu0 0.0
  %601 = vmatprep.subr.mxu0 0.0
  %602 = vmatpush1.msra.mxu0 0.0
  %603 = vmatprep.subr.mxu0 0.0
  %604 = vmatpush1.msra.mxu0 0.0
  %605 = vmatprep.subr.mxu0 0.0
  %606 = vmatpush1.msra.mxu0 0.0
  %607 = vmatprep.subr.mxu0 0.0
  %608 = vmatpush1.msra.mxu0 0.0
  %609 = vmatprep.subr.mxu0 0.0
  %610 = vmatpush1.msra.mxu0 0.0
  %611 = vmatprep.subr.mxu0 0.0
  %612 = vmatpush1.msra.mxu0 0.0
  %613 = vmatprep.subr.mxu0 0.0
  %614 = vmatpush1.msra.mxu0 0.0
  %615 = vmatprep.subr.mxu0 0.0
  %616 = vmatpush1.msra.mxu0 0.0
  %617 = vmatprep.subr.mxu0 0.0
  %618 = vmatpush1.msra.mxu0 0.0
  %619 = vmatprep.subr.mxu0 0.0
  %620 = vmatpush1.msra.mxu0 0.0
  %621 = vmatprep.subr.mxu0 0.0
  %622 = vmatpush1.msra.mxu0 0.0
  %623 = vmatprep.subr.mxu0 0.0
  %624 = vmatpush1.msra.mxu0 0.0
  %625 = vmatprep.subr.mxu0 0.0
  %626 = vmatpush1.msra.mxu0 0.0
  %627 = vmatprep.subr.mxu0 0.0
  %628 = vmatpush1.msra.mxu0 0.0
  %629 = vmatprep.subr.mxu0 0.0
  %630 = vmatpush1.msra.mxu0 0.0
  %631 = vmatprep.subr.mxu0 0.0
  %632 = vmatpush1.msra.mxu0 0.0
  %633 = vmatprep.subr.mxu0 0.0
  %634 = vmatpush1.msra.mxu0 0.0
  %635 = vmatprep.subr.mxu0 0.0
  %636 = vmatpush1.msra.mxu0 0.0
  %637 = vmatprep.subr.mxu0 0.0
  %638 = vmatpush1.msra.mxu0 0.0
  %639 = vmatprep.subr.mxu0 0.0
  %640 = vmatpush1.msra.mxu0 0.0
  %641 = vmatprep.mubr.f32.mxu0 0.0
  %642 = vmatmul.mubr.f32.gmra.mrb[0].mxu0 %v365
  %v643 = vpop.f32.mrb[0].mxu0
  %v644 = vadd.f32 %v574, %v643
  %v645 = vpop.f32.mrb[0].mxu0
  %646 = vdwg.mxu0
  %v647 = vld [vmem:[%s1 + $0x17] sm:$0x1]
  %v649 = vlaneseq
  %v650 = vshrl.u32 %v649, 7
  %v651 = vsub.s32 0, %v650
  %v652 = vrot.slane %v647, %v651
  %v654 = vsub.f32 %v24, %v652
  %v655 = vld [vmem:[%s1 + $0x18] sm:$0x1]
  %v657 = vlaneseq
  %v658 = vshrl.u32 %v657, 7
  %v659 = vsub.s32 0, %v658
  %v660 = vrot.slane %v655, %v659
  %v662 = vmul.f32 %v654, %v660
  %v663 = vld [vmem:[%s1 + $0xf] sm:$0x1]
  %v664 = vld [vmem:[%s1 + $0x10] sm:$0x1]
  %vm665 = vcmask 64512
  %v666 = vsel %vm665, %v644, 0.0
  %v667 = vrot.slane %v666, 4
  %v668 = vadd.f32 %v666, %v667
  %v669 = vrot.slane %v668, 2
  %v670 = vadd.f32 %v668, %v669
  %v671 = vrot.slane %v670, 1
  %v672 = vadd.f32 %v670, %v671
  %v673 = vmul.f32 %v672, %v71
  %v674 = vsub.f32 %v644, %v673
  %v675 = vmul.f32 %v674, %v674
  %v676 = vsel %vm665, %v675, 0.0
  %v677 = vrot.slane %v676, 4
  %v678 = vadd.f32 %v676, %v677
  %v679 = vrot.slane %v678, 2
  %v680 = vadd.f32 %v678, %v679
  %v681 = vrot.slane %v680, 1
  %v682 = vadd.f32 %v680, %v681
  %v683 = vmul.f32 %v682, %v71
  %v684 = vadd.f32 %v683, 1e-05
  %v685 = vrsqrt.pop %v684
  %v686 = vmul.f32 %v674, %v685
  %v688 = vlaneseq
  %v689 = vshrl.u32 %v688, 7
  %v690 = vsub.s32 0, %v689
  %v691 = vrot.slane %v663, %v690
  %v693 = vmul.f32 %v686, %v691
  %v695 = vlaneseq
  %v696 = vshrl.u32 %v695, 7
  %v697 = vsub.s32 0, %v696
  %v698 = vrot.slane %v664, %v697
  %v700 = vadd.f32 %v693, %v698
  %v701 = vmax.f32 %v700, 0.0
  %v702 = vld [vmem:[%s1 + $0x11] sm:$0x1]
  %v703 = vld [vmem:[%s1 + $0x12] sm:$0x1]
  %vm704 = vcmask 23552
  %v705 = vsel %vm704, %v662, 0.0
  %v706 = vrot.slane %v705, 4
  %v707 = vadd.f32 %v705, %v706
  %v708 = vrot.slane %v707, 2
  %v709 = vadd.f32 %v707, %v708
  %v710 = vrot.slane %v709, 1
  %v711 = vadd.f32 %v709, %v710
  %v712 = vmul.f32 %v711, %v71
  %v713 = vsub.f32 %v662, %v712
  %v714 = vmul.f32 %v713, %v713
  %v715 = vsel %vm704, %v714, 0.0
  %v716 = vrot.slane %v715, 4
  %v717 = vadd.f32 %v715, %v716
  %v718 = vrot.slane %v717, 2
  %v719 = vadd.f32 %v717, %v718
  %v720 = vrot.slane %v719, 1
  %v721 = vadd.f32 %v719, %v720
  %v722 = vmul.f32 %v721, %v71
  %v723 = vadd.f32 %v722, 1e-05
  %v724 = vrsqrt.pop %v723
  %v725 = vmul.f32 %v713, %v724
  %v727 = vlaneseq
  %v728 = vshrl.u32 %v727, 7
  %v729 = vsub.s32 0, %v728
  %v730 = vrot.slane %v702, %v729
  %v732 = vmul.f32 %v725, %v730
  %v734 = vlaneseq
  %v735 = vshrl.u32 %v734, 7
  %v736 = vsub.s32 0, %v735
  %v737 = vrot.slane %v703, %v736
  %v739 = vadd.f32 %v732, %v737
  %v740 = vmax.f32 %v739, 0.0
  %v741 = vld [vmem:[%s3] sm:$0xff]
  %v742 = vld [vmem:[%s3 + $0x8] sm:$0x7]
  %v744 = vsel %vm704, %v740, 0
  %vm746 = vcmask 1042432
  %v748 = vsel %vm746, %v742, 0
  %750 = vmatprep.subr.mxu0 0.0
  %751 = vmatpush1.msra.mxu0 %v748
  %752 = vmatprep.subr.mxu0 0.0
  %753 = vmatpush1.msra.mxu0 0.0
  %754 = vmatprep.subr.mxu0 0.0
  %755 = vmatpush1.msra.mxu0 0.0
  %756 = vmatprep.subr.mxu0 0.0
  %757 = vmatpush1.msra.mxu0 0.0
  %758 = vmatprep.subr.mxu0 0.0
  %759 = vmatpush1.msra.mxu0 0.0
  %760 = vmatprep.subr.mxu0 0.0
  %761 = vmatpush1.msra.mxu0 0.0
  %762 = vmatprep.subr.mxu0 0.0
  %763 = vmatpush1.msra.mxu0 0.0
  %764 = vmatprep.subr.mxu0 0.0
  %765 = vmatpush1.msra.mxu0 0.0
  %766 = vmatprep.subr.mxu0 0.0
  %767 = vmatpush1.msra.mxu0 0.0
  %768 = vmatprep.subr.mxu0 0.0
  %769 = vmatpush1.msra.mxu0 0.0
  %770 = vmatprep.subr.mxu0 0.0
  %771 = vmatpush1.msra.mxu0 0.0
  %772 = vmatprep.subr.mxu0 0.0
  %773 = vmatpush1.msra.mxu0 0.0
  %774 = vmatprep.subr.mxu0 0.0
  %775 = vmatpush1.msra.mxu0 0.0
  %776 = vmatprep.subr.mxu0 0.0
  %777 = vmatpush1.msra.mxu0 0.0
  %778 = vmatprep.subr.mxu0 0.0
  %779 = vmatpush1.msra.mxu0 0.0
  %780 = vmatprep.subr.mxu0 0.0
  %781 = vmatpush1.msra.mxu0 0.0
  %782 = vmatprep.subr.mxu0 0.0
  %783 = vmatpush1.msra.mxu0 0.0
  %784 = vmatprep.subr.mxu0 0.0
  %785 = vmatpush1.msra.mxu0 0.0
  %786 = vmatprep.subr.mxu0 0.0
  %787 = vmatpush1.msra.mxu0 0.0
  %788 = vmatprep.subr.mxu0 0.0
  %789 = vmatpush1.msra.mxu0 0.0
  %790 = vmatprep.subr.mxu0 0.0
  %791 = vmatpush1.msra.mxu0 0.0
  %792 = vmatprep.subr.mxu0 0.0
  %793 = vmatpush1.msra.mxu0 0.0
  %794 = vmatprep.subr.mxu0 0.0
  %795 = vmatpush1.msra.mxu0 0.0
  %796 = vmatprep.subr.mxu0 0.0
  %797 = vmatpush1.msra.mxu0 0.0
  %798 = vmatprep.subr.mxu0 0.0
  %799 = vmatpush1.msra.mxu0 0.0
  %800 = vmatprep.subr.mxu0 0.0
  %801 = vmatpush1.msra.mxu0 0.0
  %802 = vmatprep.subr.mxu0 0.0
  %803 = vmatpush1.msra.mxu0 0.0
  %804 = vmatprep.subr.mxu0 0.0
  %805 = vmatpush1.msra.mxu0 0.0
  %806 = vmatprep.subr.mxu0 0.0
  %807 = vmatpush1.msra.mxu0 0.0
  %808 = vmatprep.subr.mxu0 0.0
  %809 = vmatpush1.msra.mxu0 0.0
  %810 = vmatprep.subr.mxu0 0.0
  %811 = vmatpush1.msra.mxu0 0.0
  %812 = vmatprep.subr.mxu0 0.0
  %813 = vmatpush1.msra.mxu0 0.0
  %814 = vmatprep.mubr.f32.mxu0 0.0
  %815 = vmatmul.mubr.f32.gmra.mrb[0].mxu0 %v744
  %v816 = vpop.f32.mrb[0].mxu0
  %v817 = vadd.f32 0.0, %v816
  %v818 = vpop.f32.mrb[0].mxu0
  %819 = vdwg.mxu0
  %v821 = vsel %vm665, %v701, 0
  %823 = vmatprep.subr.mxu0 0.0
  %824 = vmatpush1.msra.mxu0 %v741
  %825 = vmatprep.subr.mxu0 0.0
  %826 = vmatpush1.msra.mxu0 0.0
  %827 = vmatprep.subr.mxu0 0.0
  %828 = vmatpush1.msra.mxu0 0.0
  %829 = vmatprep.subr.mxu0 0.0
  %830 = vmatpush1.msra.mxu0 0.0
  %831 = vmatprep.subr.mxu0 0.0
  %832 = vmatpush1.msra.mxu0 0.0
  %833 = vmatprep.subr.mxu0 0.0
  %834 = vmatpush1.msra.mxu0 0.0
  %835 = vmatprep.subr.mxu0 0.0
  %836 = vmatpush1.msra.mxu0 0.0
  %837 = vmatprep.subr.mxu0 0.0
  %838 = vmatpush1.msra.mxu0 0.0
  %839 = vmatprep.subr.mxu0 0.0
  %840 = vmatpush1.msra.mxu0 0.0
  %841 = vmatprep.subr.mxu0 0.0
  %842 = vmatpush1.msra.mxu0 0.0
  %843 = vmatprep.subr.mxu0 0.0
  %844 = vmatpush1.msra.mxu0 0.0
  %845 = vmatprep.subr.mxu0 0.0
  %846 = vmatpush1.msra.mxu0 0.0
  %847 = vmatprep.subr.mxu0 0.0
  %848 = vmatpush1.msra.mxu0 0.0
  %849 = vmatprep.subr.mxu0 0.0
  %850 = vmatpush1.msra.mxu0 0.0
  %851 = vmatprep.subr.mxu0 0.0
  %852 = vmatpush1.msra.mxu0 0.0
  %853 = vmatprep.subr.mxu0 0.0
  %854 = vmatpush1.msra.mxu0 0.0
  %855 = vmatprep.subr.mxu0 0.0
  %856 = vmatpush1.msra.mxu0 0.0
  %857 = vmatprep.subr.mxu0 0.0
  %858 = vmatpush1.msra.mxu0 0.0
  %859 = vmatprep.subr.mxu0 0.0
  %860 = vmatpush1.msra.mxu0 0.0
  %861 = vmatprep.subr.mxu0 0.0
  %862 = vmatpush1.msra.mxu0 0.0
  %863 = vmatprep.subr.mxu0 0.0
  %864 = vmatpush1.msra.mxu0 0.0
  %865 = vmatprep.subr.mxu0 0.0
  %866 = vmatpush1.msra.mxu0 0.0
  %867 = vmatprep.subr.mxu0 0.0
  %868 = vmatpush1.msra.mxu0 0.0
  %869 = vmatprep.subr.mxu0 0.0
  %870 = vmatpush1.msra.mxu0 0.0
  %871 = vmatprep.subr.mxu0 0.0
  %872 = vmatpush1.msra.mxu0 0.0
  %873 = vmatprep.subr.mxu0 0.0
  %874 = vmatpush1.msra.mxu0 0.0
  %875 = vmatprep.subr.mxu0 0.0
  %876 = vmatpush1.msra.mxu0 0.0
  %877 = vmatprep.subr.mxu0 0.0
  %878 = vmatpush1.msra.mxu0 0.0
  %879 = vmatprep.subr.mxu0 0.0
  %880 = vmatpush1.msra.mxu0 0.0
  %881 = vmatprep.subr.mxu0 0.0
  %882 = vmatpush1.msra.mxu0 0.0
  %883 = vmatprep.subr.mxu0 0.0
  %884 = vmatpush1.msra.mxu0 0.0
  %885 = vmatprep.subr.mxu0 0.0
  %886 = vmatpush1.msra.mxu0 0.0
  %887 = vmatprep.mubr.f32.mxu0 0.0
  %888 = vmatmul.mubr.f32.gmra.mrb[0].mxu0 %v821
  %v889 = vpop.f32.mrb[0].mxu0
  %v890 = vadd.f32 %v817, %v889
  %v891 = vpop.f32.mrb[0].mxu0
  %892 = vdwg.mxu0
  %v893 = vld [vmem:[%s1 + $0x13] sm:$0x1]
  %v895 = vlaneseq
  %v896 = vshrl.u32 %v895, 7
  %v897 = vsub.s32 0, %v896
  %v898 = vrot.slane %v893, %v897
  %v900 = vadd.f32 %v890, %v898
  %v901 = vld [vmem:[%s1 + $0x14] sm:$0x1]
  %v902 = vld [vmem:[%s1 + $0x15] sm:$0x1]
  %v903 = vsel %vm63, %v900, 0.0
  %v904 = vrot.slane %v903, 4
  %v905 = vadd.f32 %v903, %v904
  %v906 = vrot.slane %v905, 2
  %v907 = vadd.f32 %v905, %v906
  %v908 = vrot.slane %v907, 1
  %v909 = vadd.f32 %v907, %v908
  %v910 = vmul.f32 %v909, %v71
  %v911 = vsub.f32 %v900, %v910
  %v912 = vmul.f32 %v911, %v911
  %v913 = vsel %vm63, %v912, 0.0
  %v914 = vrot.slane %v913, 4
  %v915 = vadd.f32 %v913, %v914
  %v916 = vrot.slane %v915, 2
  %v917 = vadd.f32 %v915, %v916
  %v918 = vrot.slane %v917, 1
  %v919 = vadd.f32 %v917, %v918
  %v920 = vmul.f32 %v919, %v71
  %v921 = vadd.f32 %v920, 1e-05
  %v922 = vrsqrt.pop %v921
  %v923 = vmul.f32 %v911, %v922
  %v925 = vlaneseq
  %v926 = vshrl.u32 %v925, 7
  %v927 = vsub.s32 0, %v926
  %v928 = vrot.slane %v901, %v927
  %v930 = vmul.f32 %v923, %v928
  %v932 = vlaneseq
  %v933 = vshrl.u32 %v932, 7
  %v934 = vsub.s32 0, %v933
  %v935 = vrot.slane %v902, %v934
  %v937 = vadd.f32 %v930, %v935
  %v938 = vmax.f32 %v937, 0.0
  %v939 = vld [vmem:[%s3 + $0x10] sm:$0xff]
  %v940 = vld [vmem:[%s3 + $0x18] sm:$0xff]
  %v941 = vld [vmem:[%s3 + $0x20] sm:$0xff]
  %v942 = vld [vmem:[%s3 + $0x28] sm:$0xff]
  %v943 = vld [vmem:[%s1 + $0x16] sm:$0x1]
  %v945 = vlaneseq
  %v946 = vshrl.u32 %v945, 7
  %v947 = vsub.s32 0, %v946
  %v948 = vrot.slane %v943, %v947
  %v951 = vsel %vm63, %v938, 0
  %953 = vmatprep.subr.mxu0 0.0
  %954 = vmatpush1.msra.mxu0 %v939
  %955 = vmatprep.subr.mxu0 0.0
  %956 = vmatpush1.msra.mxu0 %v940
  %957 = vmatprep.subr.mxu0 0.0
  %958 = vmatpush1.msra.mxu0 %v941
  %959 = vmatprep.subr.mxu0 0.0
  %960 = vmatpush1.msra.mxu0 %v942
  %961 = vmatprep.subr.mxu0 0.0
  %962 = vmatpush1.msra.mxu0 0.0
  %963 = vmatprep.subr.mxu0 0.0
  %964 = vmatpush1.msra.mxu0 0.0
  %965 = vmatprep.subr.mxu0 0.0
  %966 = vmatpush1.msra.mxu0 0.0
  %967 = vmatprep.subr.mxu0 0.0
  %968 = vmatpush1.msra.mxu0 0.0
  %969 = vmatprep.subr.mxu0 0.0
  %970 = vmatpush1.msra.mxu0 0.0
  %971 = vmatprep.subr.mxu0 0.0
  %972 = vmatpush1.msra.mxu0 0.0
  %973 = vmatprep.subr.mxu0 0.0
  %974 = vmatpush1.msra.mxu0 0.0
  %975 = vmatprep.subr.mxu0 0.0
  %976 = vmatpush1.msra.mxu0 0.0
  %977 = vmatprep.subr.mxu0 0.0
  %978 = vmatpush1.msra.mxu0 0.0
  %979 = vmatprep.subr.mxu0 0.0
  %980 = vmatpush1.msra.mxu0 0.0
  %981 = vmatprep.subr.mxu0 0.0
  %982 = vmatpush1.msra.mxu0 0.0
  %983 = vmatprep.subr.mxu0 0.0
  %984 = vmatpush1.msra.mxu0 0.0
  %985 = vmatprep.subr.mxu0 0.0
  %986 = vmatpush1.msra.mxu0 0.0
  %987 = vmatprep.subr.mxu0 0.0
  %988 = vmatpush1.msra.mxu0 0.0
  %989 = vmatprep.subr.mxu0 0.0
  %990 = vmatpush1.msra.mxu0 0.0
  %991 = vmatprep.subr.mxu0 0.0
  %992 = vmatpush1.msra.mxu0 0.0
  %993 = vmatprep.subr.mxu0 0.0
  %994 = vmatpush1.msra.mxu0 0.0
  %995 = vmatprep.subr.mxu0 0.0
  %996 = vmatpush1.msra.mxu0 0.0
  %997 = vmatprep.subr.mxu0 0.0
  %998 = vmatpush1.msra.mxu0 0.0
  %999 = vmatprep.subr.mxu0 0.0
  %1000 = vmatpush1.msra.mxu0 0.0
  %1001 = vmatprep.subr.mxu0 0.0
  %1002 = vmatpush1.msra.mxu0 0.0
  %1003 = vmatprep.subr.mxu0 0.0
  %1004 = vmatpush1.msra.mxu0 0.0
  %1005 = vmatprep.subr.mxu0 0.0
  %1006 = vmatpush1.msra.mxu0 0.0
  %1007 = vmatprep.subr.mxu0 0.0
  %1008 = vmatpush1.msra.mxu0 0.0
  %1009 = vmatprep.subr.mxu0 0.0
  %1010 = vmatpush1.msra.mxu0 0.0
  %1011 = vmatprep.subr.mxu0 0.0
  %1012 = vmatpush1.msra.mxu0 0.0
  %1013 = vmatprep.subr.mxu0 0.0
  %1014 = vmatpush1.msra.mxu0 0.0
  %1015 = vmatprep.subr.mxu0 0.0
  %1016 = vmatpush1.msra.mxu0 0.0
  %1017 = vmatprep.mubr.f32.mxu0 0.0
  %1018 = vmatmul.mubr.f32.gmra.mrb[0].mxu0 %v951
  %v1019 = vpop.f32.mrb[0].mxu0
  %v1020 = vadd.f32 %v948, %v1019
  %v1021 = vpop.f32.mrb[0].mxu0
  %1022 = vdwg.mxu0
  %vm1023 = vcmask 15360
  %v1024 = vsel %vm1023, %v1020, -inf
  %1025 = vmax.xlane.f32.xlu0 %v1024
  %v1026 = vpop.xlane.xlu0 %1025
  %v1027 = vsub.f32 %v1020, %v1026
  %v1028 = vmul.f32 %v1027, 1.442695
  %v1029 = vpow.pop %v1028
  %v1030 = vsel %vm1023, %v1029, 0.0
  %1031 = vadd.xlane.f32.xlu0 %v1030
  %v1032 = vpop.xlane.xlu0 %1031
  %v1033 = vrcp.pop %v1032
  %v1034 = vmul.f32 %v1029, %v1033
  %1035 = vst.msk [vmem:[%s4] sm:$0xff] %vm1023, %v1034
  // Predicated region
  $region18: #{forward.1} parent=0 // pred_check
    _
  $region19: #{forward.1} parent=0 // pred_check_branch
    %1037 = sbr.rel (0) target = $region21
  $region20: #{forward.1} parent=0 // pred_region
    _
  $region21: #{forward.1} parent=0 // pred_fallthru
    _
  // Predicated region
  $region22: #{forward.1} parent=0 // pred_check
    _
  $region23: #{forward.1} parent=0 // pred_check_branch
    %1039 = sbr.rel (0) target = $region25
  $region24: #{forward.1} parent=0 // pred_region
    _
  $region25: #{forward.1} parent=0 // pred_fallthru
    _

</llo_original>
